<compile_context>
chip_gen: v7x
topology: tpu7x:2x2x1
jax: 0.10.0
libtpu: 0.0.40
codegen_flags: <defaults>
</compile_context>

<pallas_src>
import functools

import jax
import jax.numpy as jnp
from jax.experimental import pallas as pl
from jax.experimental.pallas import tpu as pltpu


def _round_up(n, m):
    return ((n + m - 1) // m) * m


def _nnwa_kernel(w_ref, x_ref, o_ref, *, bb):
    # w_ref: (G, C) mixing matrix (group-mean weights scattered over channels)
    # x_ref: (bb, C, tile) current (batch-block, time-tile) slab
    # o_ref: (bb, G, tile)
    w = w_ref[...]
    for b in range(bb):  # bb is small and static -> unrolled tiny dots
        o_ref[b] = jnp.dot(
            w, x_ref[b], preferred_element_type=jnp.float32
        ).astype(o_ref.dtype)


def _choose_tiles(B, C, G, T, tile_t, batch_tile, itemsize):
    # Time tile: lane-dense multiple of 128 (or the full T when T < 128, which
    # satisfies the "equals full array dim" exception).
    if T <= 128:
        tile = T
    else:
        tile = min(int(tile_t), _round_up(T, 128))
        tile = max(128, (tile // 128) * 128)
    grid_t = pl.cdiv(T, tile)

    if batch_tile is not None:
        bb = max(1, min(int(batch_tile), B))
    else:
        # Batch block so each grid step moves a few MB of HBM even when T is
        # short; keep >= 4 total grid steps (when available) for v7x megacore.
        target_bytes = 4 << 20
        per_batch_bytes = (C + G) * tile * itemsize
        bb = max(1, min(B, target_bytes // max(per_batch_bytes, 1)))
        min_steps = min(4, B * grid_t)
        while bb > 1 and pl.cdiv(B, bb) * grid_t < min_steps:
            bb = max(1, bb // 2)
    return tile, bb


@functools.partial(jax.jit, static_argnames=("tile_t", "batch_tile"))
def nnwa_forward(x, w, *, tile_t=65536, batch_tile=None):
    """x: (B, C, T), w: (G, C) -> (B, G, T). out[b,g,t] = sum_c w[g,c] x[b,c,t]."""
    B, C, T = x.shape
    G = w.shape[0]
    itemsize = jnp.dtype(x.dtype).itemsize

    tile, bb = _choose_tiles(B, C, G, T, tile_t, batch_tile, itemsize)
    grid = (pl.cdiv(B, bb), pl.cdiv(T, tile))

    # Per-step working set: double-buffered x (bb,C,tile) + out (bb,G,tile) + W.
    # Cap below v7x's 64 MiB physical VMEM; floor gives room on v5e/v6e.
    per_step_bytes = bb * (C + G) * tile * itemsize
    vmem_limit = int(min(48 << 20, max(16 << 20, 4 * per_step_bytes)))

    return pl.pallas_call(
        functools.partial(_nnwa_kernel, bb=bb),
        out_shape=jax.ShapeDtypeStruct((B, G, T), x.dtype),
        grid=grid,
        in_specs=[
            # Constant-index mixing matrix: DMA'd once, reused every step.
            pl.BlockSpec((G, C), lambda i, j: (0, 0)),
            # (bb, C, tile) slab per grid step; ragged last blocks overhang.
            pl.BlockSpec((bb, C, tile), lambda i, j: (i, 0, j)),
        ],
        out_specs=pl.BlockSpec((bb, G, tile), lambda i, j: (i, 0, j)),
        compiler_params=pltpu.CompilerParams(
            dimension_semantics=("parallel", "parallel"),
            vmem_limit_bytes=vmem_limit,
        ),
    )(w, x)


def build_mixing_matrix(index_l, num_channels, dtype=jnp.float32):
    """Fold channel gather + constant-weight Linear into one (G, C) matrix.

    index_l uses the PyTorch module's 1-based convention (the module subtracts
    1 internally); each group's Linear weight is 1/len(group) with no bias.
    """
    import numpy as np

    G = len(index_l)
    w = np.zeros((G, num_channels), dtype=np.float32)
    for g, row in enumerate(index_l):
        inv = 1.0 / len(row)
        for idx in row:
            w[g, idx - 1] += inv  # += handles (unlikely) repeated indices
    return jnp.asarray(w, dtype=dtype)


def nnwa_reference(x, index_l):
    """Plain-JAX reference mirroring the PyTorch forward exactly."""
    xt = jnp.transpose(x, (0, 2, 1))  # (B, T, C)
    outs = []
    for row in index_l:
        idx = jnp.asarray([i - 1 for i in row], dtype=jnp.int32)
        grp = xt[:, :, idx]                                  # (B, T, len)
        outs.append(jnp.mean(grp, axis=2, keepdims=True))    # weight = 1/len
    y = jnp.concatenate(outs, axis=2)                        # (B, T, G)
    return jnp.transpose(y, (0, 2, 1))                       # (B, G, T)


if __name__ == "__main__":
    # Small, deterministic setup consistent with the module's forward:
    # x has shape (B, C, T); IndexL is a list of 6 channel-index groups (1-based).
    B, C, T = 2, 8, 16
    index_l = [
        [1, 2],
        [3, 4],
        [5, 6],
        [7, 8],
        [1, 3, 5, 7],
        [2, 4, 6, 8],
    ]

    key = jax.random.PRNGKey(0)
    x = jax.random.normal(key, (B, C, T), dtype=jnp.float32)
    w = build_mixing_matrix(index_l, C)  # (6, C), deterministic

    out = jax.block_until_ready(nnwa_forward(x, w))
    ref = nnwa_reference(x, index_l)
    assert out.shape == (B, len(index_l), T), out.shape
    assert jnp.allclose(out, ref, atol=1e-5, rtol=1e-5), "mismatch vs reference"

    # Exercise the ragged-tail path (no wrapper pad/slice): T not a multiple of
    # the time tile and B not a multiple of the batch block -> overhanging
    # blocks whose OOB stores Pallas drops.
    B2, T2 = 3, 300
    x2 = jax.random.normal(jax.random.PRNGKey(1), (B2, C, T2), dtype=jnp.float32)
    out2 = jax.block_until_ready(nnwa_forward(x2, w, tile_t=128, batch_tile=2))
    ref2 = nnwa_reference(x2, index_l)
    assert out2.shape == (B2, len(index_l), T2), out2.shape
    assert jnp.allclose(out2, ref2, atol=1e-5, rtol=1e-5), "mismatch (ragged tail)"

    print("KERNEL_OK")
</pallas_src>

<mosaic_0001>
module attributes {stable_mosaic.version = 11 : i64} {
  func.func @_nnwa_kernel(%arg0: i32, %arg1: i32, %arg2: memref<6x8xf32, #tpu.memory_space<vmem>>, %arg3: memref<1x8x16xf32, #tpu.memory_space<vmem>>, %arg4: memref<1x6x16xf32, #tpu.memory_space<vmem>>) attributes {dimension_semantics = [#tpu.dimension_semantics<parallel>, #tpu.dimension_semantics<parallel>], iteration_bounds = array<i64: 2, 1>, scalar_prefetch = 0 : i64, scratch_operands = 0 : i64, tpu.core_type = #tpu.core_type<tc>, window_params = [{pipeline_mode = #tpu.pipeline_mode<synchronous>, transform_indices = @transform_0, window_bounds = array<i64: 6, 8>}, {transform_indices = @transform_1, window_bounds = array<i64: 1, 8, 16>}, {transform_indices = @transform_2, window_bounds = array<i64: 1, 6, 16>}]} {
    %c0 = arith.constant 0 : index
    %c0_0 = arith.constant 0 : index
    %0 = vector.load %arg2[%c0, %c0_0] : memref<6x8xf32, #tpu.memory_space<vmem>>, vector<6x8xf32>
    %c0_1 = arith.constant 0 : index
    %c0_2 = arith.constant 0 : index
    %c0_3 = arith.constant 0 : index
    %1 = vector.load %arg3[%c0_1, %c0_2, %c0_3] : memref<1x8x16xf32, #tpu.memory_space<vmem>>, vector<1x8x16xf32>
    %2 = vector.shape_cast %1 : vector<1x8x16xf32> to vector<8x16xf32>
    %cst = arith.constant dense<0.000000e+00> : vector<6x16xf32>
    %3 = tpu.matmul %0, %2, %cst {dimension_numbers = #tpu.dot_dimension_numbers<[1], [0], [0], [1], [0, 0, 1, 1], [], []>} : vector<6x8xf32>, vector<8x16xf32>, vector<6x16xf32> -> vector<6x16xf32>
    %c0_4 = arith.constant 0 : index
    %c0_5 = arith.constant 0 : index
    %c0_6 = arith.constant 0 : index
    %4 = vector.load %arg4[%c0_4, %c0_5, %c0_6] : memref<1x6x16xf32, #tpu.memory_space<vmem>>, vector<1x6x16xf32>
    %5 = vector.shape_cast %4 : vector<1x6x16xf32> to vector<6x16xf32>
    %6 = vector.shape_cast %3 : vector<6x16xf32> to vector<1x6x16xf32>
    tpu.vector_store %arg4[%c0_4, %c0_5, %c0_6], %6 {strides = array<i32>} : memref<1x6x16xf32, #tpu.memory_space<vmem>>, vector<1x6x16xf32>,
    return
  }
  func.func @transform_0(%arg0: i32, %arg1: i32) -> (i32, i32) {
    %c0_i32 = arith.constant 0 : i32
    %c0_i32_0 = arith.constant 0 : i32
    %c0_i32_1 = arith.constant 0 : i32
    return %c0_i32, %c0_i32_0 : i32, i32
  }
  func.func @transform_1(%arg0: i32, %arg1: i32) -> (i32, i32, i32) {
    %c0_i32 = arith.constant 0 : i32
    %c0_i32_0 = arith.constant 0 : i32
    return %arg0, %c0_i32, %arg1 : i32, i32, i32
  }
  func.func @transform_2(%arg0: i32, %arg1: i32) -> (i32, i32, i32) {
    %c0_i32 = arith.constant 0 : i32
    %c0_i32_0 = arith.constant 0 : i32
    return %arg0, %c0_i32, %arg1 : i32, i32, i32
  }
}

</mosaic_0001>

<llo_original>
// kernel: nnwa_forward.1
$region0: #{nnwa_forward.1}
  #allocation0 [shape = 'u32[]', space=smem, size = 0x4, offset = 0x4, fixed_abs, tag = 'smem constant byte address 0x4 - core index']
  #allocation1 [shape = 'u32[144,128]{1,0:T(1,128)}', space=vmem, size = 0x12000, scoped, tag = 'internal scratch']
  %s0 = inlined_call_operand.hbm [shape: f32[6,8], index: 0, kind: input, shape index: {}]
  %s1 = inlined_call_operand.hbm [shape: f32[2,8,16], index: 1, kind: input, shape index: {}]
  %s2 = inlined_call_operand.vmem [shape: f32[2,6,16], index: 2, kind: output, shape index: {}]
  %s3 = sld [smem:[#allocation0]]
  $region49: #{nnwa_forward.1} parent=0
    _
  %s5 = ssub.s32 1, %s3
  %s6 = scalar_select 0, %s5, %s3
  $region1: #{nnwa_forward.1} parent=0
    #allocation2 [shape = 'u8[4096]{0}', space=vmem, size = 0x1000, scoped, tag = 'input window, operand 0, single buffered']
    #allocation3 [shape = 's32[2]{0}', space=sflag, size = 0x8, scoped, tag = 'scoped memory for nnwa_forward.1']
    #allocation4 [shape = 'u8[8192]{0}', space=vmem, size = 0x2000, scoped, tag = 'input window, operand 1']
    #allocation5 [shape = 's32[2]{0}', space=sflag, size = 0x8, scoped, tag = 'scoped memory for nnwa_forward.1']
    %7 = vsyncpa [#allocation3], 0
    %8 = vsyncpa [#allocation5], 0
    %s9 = scalar_lea.sflag [#allocation5], 1
    %10 = vsyncpa %s9, 0
    loop: start=0, step=1, limit=4
    $region2: #{nnwa_forward.1} parent=1 // loop_pre_header
      _
    $region3: #{nnwa_forward.1} parent=1 // loop_header
      %s12 = sphi 0, %s16
      %p13 = scmp.ge.s32.totalorder %s12, 4
      %s19 = sphi 0, %s31
      %s20 = sphi 0, %s27
      %s21 = sphi 0, %s19
      %s22 = sphi 0, %s20
      %s23 = sphi 0, %s21
      %s24 = sphi 0, %s22
      %s32 = sphi 0, %s32
      %s34 = sphi 0, %s32
      %s35 = sphi 0, %s34
      %s49 = sphi 0, %s35
      %s57 = sphi 0, %s59
      %s60 = sphi 0, %s57
      %s61 = sphi 0, %s60
      %s77 = sphi 0, %s61
      %s85 = sphi 0, %s87
      %s88 = sphi 0, %s85
      %s89 = sphi 0, %s88
      %s105 = sphi 0, %s89
    $region4: #{nnwa_forward.1} parent=1 // loop_header_branch
      %15 = sbr.rel (%p13) target = $region8
    $region5: #{nnwa_forward.1} parent=1 // loop_body
      %s17 = ssub.s32 %s12, 1
      %s18 = ssub.s32 %s12, 2
      %s25 = sadd.s32 1, %s20
      %p26 = scmp.ge.s32.totalorder %s25, 1
      %s27 = scalar_select %p26, 0, %s25
      %s28 = sadd.s32 1, %s19
      %s29 = scalar_select %p26, %s28, %s19
      %p30 = scmp.ge.s32.totalorder %s29, 2
      %s31 = scalar_select %p30, 0, %s29
      %s33 = sadd.s32 %s32, 1
      %p36 = scmp.eq.s32.totalorder %s12, 1
      %p37 = scmp.ne.s32.totalorder %s32, %s34
      %p38 = scmp.eq.s32.totalorder %s12, 0
      %p39 = por %p37, %p38
      %p40 = scmp.ne.s32.totalorder %s32, %s34
      %p41 = scmp.eq.s32.totalorder %s17, 1
      %p42 = por %p40, %p41
      %p43 = scmp.ne.s32.totalorder %s34, %s35
      %p44 = scmp.eq.s32.totalorder %s17, 0
      %p45 = por %p43, %p44
      %p46 = scmp.ne.s32.totalorder %s34, %s35
      %p47 = scmp.eq.s32.totalorder %s18, 1
      %p48 = por %p46, %p47
      %p50 = scmp.ne.s32.totalorder %s35, %s49
      %p51 = scmp.eq.s32.totalorder %s18, 0
      %p52 = por %p50, %p51
      %s53 = ssub.s32 %s19, %s31
      %s54 = ssub.s32 %s20, %s27
      %s55 = sor.u32 %s53, %s54
      %p56 = scmp.eq.s32.totalorder %s55, 0
      %s58 = sadd.s32 %s57, 1
      %s59 = scalar_select %p56, %s57, %s58
      %p62 = pneg %p56
      %p63 = scmp.eq.s32.totalorder %s12, 1
      %p64 = por %p62, %p63
      %p65 = scmp.ne.s32.totalorder %s57, %s60
      %p66 = scmp.eq.s32.totalorder %s12, 0
      %p67 = por %p65, %p66
      %p68 = scmp.ne.s32.totalorder %s57, %s60
      %p69 = scmp.eq.s32.totalorder %s17, 1
      %p70 = por %p68, %p69
      %p71 = scmp.ne.s32.totalorder %s60, %s61
      %p72 = scmp.eq.s32.totalorder %s17, 0
      %p73 = por %p71, %p72
      %p74 = scmp.ne.s32.totalorder %s60, %s61
      %p75 = scmp.eq.s32.totalorder %s18, 1
      %p76 = por %p74, %p75
      %p78 = scmp.ne.s32.totalorder %s61, %s77
      %p79 = scmp.eq.s32.totalorder %s18, 0
      %p80 = por %p78, %p79
      %s81 = ssub.s32 %s19, %s31
      %s82 = ssub.s32 %s20, %s27
      %s83 = sor.u32 %s81, %s82
      %p84 = scmp.eq.s32.totalorder %s83, 0
      %s86 = sadd.s32 %s85, 1
      %s87 = scalar_select %p84, %s85, %s86
      %p90 = pneg %p84
      %p91 = scmp.eq.s32.totalorder %s12, 1
      %p92 = por %p90, %p91
      %p93 = scmp.ne.s32.totalorder %s85, %s88
      %p94 = scmp.eq.s32.totalorder %s12, 0
      %p95 = por %p93, %p94
      %p96 = scmp.ne.s32.totalorder %s85, %s88
      %p97 = scmp.eq.s32.totalorder %s17, 1
      %p98 = por %p96, %p97
      %p99 = scmp.ne.s32.totalorder %s88, %s89
      %p100 = scmp.eq.s32.totalorder %s17, 0
      %p101 = por %p99, %p100
      %p102 = scmp.ne.s32.totalorder %s88, %s89
      %p103 = scmp.eq.s32.totalorder %s18, 1
      %p104 = por %p102, %p103
      %p106 = scmp.ne.s32.totalorder %s89, %s105
      %p107 = scmp.eq.s32.totalorder %s18, 0
      %p108 = por %p106, %p107
      %p109 = scmp.le.s32.totalorder 1, %s12
      %p110 = scmp.lt.s32.totalorder %s12, 3
      %p111 = pnand %p109, %p110
      %p112 = pneg %p111
      // Predicated region
      $region9: #{nnwa_forward.1} parent=5 // pred_check
        _
      $region10: #{nnwa_forward.1} parent=5 // pred_check_branch
        %114 = sbr.rel (%p111) target = $region12
      $region11: #{nnwa_forward.1} parent=5 // pred_region
        %s115 = ssub.s32 %s12, 1
        // Predicated region
        $region13: #{nnwa_forward.1} parent=11 // pred_check
          %p116 = pneg %p45
        $region14: #{nnwa_forward.1} parent=11 // pred_check_branch
          %118 = sbr.rel (%p116) target = $region16
        $region15: #{nnwa_forward.1} parent=11 // pred_region
          %s120 = ssub.s32 128, 128
          %121 = vsyncadd [#allocation3], %s120
          %s123 = sshll.u32 [#allocation2], 4
          %s124 = int_to_ptr.vmem [resolvable:$true] %s123
          %126 = dma.hbm_to_vmem [thread:$0]  %s0, 128, %s124, [#allocation3]
        $region16: #{nnwa_forward.1} parent=11 // pred_fallthru
          _
      $region12: #{nnwa_forward.1} parent=5 // pred_fallthru
        _
      %p127 = scmp.lt.s32.totalorder %s12, 2
      // Predicated region
      $region17: #{nnwa_forward.1} parent=5 // pred_check
        %p128 = pneg %p127
      $region18: #{nnwa_forward.1} parent=5 // pred_check_branch
        %130 = sbr.rel (%p128) target = $region20
      $region19: #{nnwa_forward.1} parent=5 // pred_region
        // Predicated region
        $region21: #{nnwa_forward.1} parent=19 // pred_check
          %p131 = pneg %p67
        $region22: #{nnwa_forward.1} parent=19 // pred_check_branch
          %133 = sbr.rel (%p131) target = $region24
        $region23: #{nnwa_forward.1} parent=19 // pred_region
          %s134 = sand.u32 %s57, 1
          %s135 = scalar_lea.sflag [#allocation5], %s134
          %s136 = sand.u32 %s57, 1
          %s137 = smul.addr %s136, 8
          %s138 = scalar_lea.vmem [#allocation4], %s137
          %s140 = ssub.s32 128, 128
          %141 = vsyncadd %s135, %s140
          %s142 = sadd.s32 %s20, %s19
          %s143 = smul.addr %s142, 128
          %s144 = scalar_lea.hbm %s1, %s143
          %s146 = sshll.u32 %s138, 4
          %s147 = int_to_ptr.vmem [resolvable:$true] %s146
          %149 = dma.hbm_to_vmem [thread:$0]  %s144, 128, %s147, %s135
        $region24: #{nnwa_forward.1} parent=19 // pred_fallthru
          _
      $region20: #{nnwa_forward.1} parent=5 // pred_fallthru
        _
      %p150 = scmp.le.s32.totalorder 1, %s12
      %p151 = scmp.lt.s32.totalorder %s12, 3
      %p152 = pnand %p150, %p151
      %p153 = pneg %p152
      // Predicated region
      $region25: #{nnwa_forward.1} parent=5 // pred_check
        _
      $region26: #{nnwa_forward.1} parent=5 // pred_check_branch
        %155 = sbr.rel (%p152) target = $region28
      $region27: #{nnwa_forward.1} parent=5 // pred_region
        %s156 = ssub.s32 %s12, 1
        // Predicated region
        $region29: #{nnwa_forward.1} parent=27 // pred_check
          %p157 = pneg %p45
        $region30: #{nnwa_forward.1} parent=27 // pred_check_branch
          %159 = sbr.rel (%p157) target = $region32
        $region31: #{nnwa_forward.1} parent=27 // pred_region
          %160 = dma.done [#allocation3], 128
        $region32: #{nnwa_forward.1} parent=27 // pred_fallthru
          _
        %s161 = sand.u32 %s60, 1
        %s162 = scalar_lea.sflag [#allocation5], %s161
        %s163 = sand.u32 %s60, 1
        %s164 = smul.addr %s163, 8
        %s165 = scalar_lea.vmem [#allocation4], %s164
        // Predicated region
        $region33: #{nnwa_forward.1} parent=27 // pred_check
          %p166 = pneg %p73
        $region34: #{nnwa_forward.1} parent=27 // pred_check_branch
          %168 = sbr.rel (%p166) target = $region36
        $region35: #{nnwa_forward.1} parent=27 // pred_region
          %169 = dma.done %s162, 128
        $region36: #{nnwa_forward.1} parent=27 // pred_fallthru
          _
        %p170 = pneg %p45
        %p171 = pneg %p42
        %s172 = sand.u32 %s60, 1
        %s173 = scalar_lea.sflag [#allocation5], %s172
        %s174 = sand.u32 %s60, 1
        %s175 = smul.addr %s174, 8
        %s176 = scalar_lea.vmem [#allocation4], %s175
        %p177 = pneg %p73
        %p178 = pneg %p70
        %p179 = pneg %p101
        %p180 = pneg %p98
        %p181 = scmp.lt.s32.totalorder %s21, 1
        %s182 = scalar_select %p181, %s21, 1
        %p183 = scmp.lt.s32.totalorder %s22, 0
        %s184 = scalar_select %p183, %s22, 0
        %s185 = sadd.s32 %s184, %s182
        %s186 = smul.addr %s185, 8
        %s187 = scalar_lea.vmem %s2, %s186
        %p188 = scmp.lt.s32.totalorder %s21, 1
        %s189 = scalar_select %p188, %s21, 1
        %p190 = scmp.lt.s32.totalorder %s22, 0
        %s191 = scalar_select %p190, %s22, 0
        %s192 = sadd.s32 %s191, %s189
        %s193 = smul.addr %s192, 8
        %s194 = scalar_lea.vmem %s2, %s193
        %v195 = vld [vmem:[#allocation2] sm:$0x3f]
        %v196 = vld [vmem:[%s165] sm:$0xff]
        %vm197 = vcmask 64512
        %v199 = vsel %vm197, %v195, 0
        %201 = vmatprep.subr.mxu0 0.0
        %202 = vmatpush1.msra.mxu0 %v196
        %203 = vmatprep.subr.mxu0 0.0
        %204 = vmatpush1.msra.mxu0 0.0
        %205 = vmatprep.subr.mxu0 0.0
        %206 = vmatpush1.msra.mxu0 0.0
        %207 = vmatprep.subr.mxu0 0.0
        %208 = vmatpush1.msra.mxu0 0.0
        %209 = vmatprep.subr.mxu0 0.0
        %210 = vmatpush1.msra.mxu0 0.0
        %211 = vmatprep.subr.mxu0 0.0
        %212 = vmatpush1.msra.mxu0 0.0
        %213 = vmatprep.subr.mxu0 0.0
        %214 = vmatpush1.msra.mxu0 0.0
        %215 = vmatprep.subr.mxu0 0.0
        %216 = vmatpush1.msra.mxu0 0.0
        %217 = vmatprep.subr.mxu0 0.0
        %218 = vmatpush1.msra.mxu0 0.0
        %219 = vmatprep.subr.mxu0 0.0
        %220 = vmatpush1.msra.mxu0 0.0
        %221 = vmatprep.subr.mxu0 0.0
        %222 = vmatpush1.msra.mxu0 0.0
        %223 = vmatprep.subr.mxu0 0.0
        %224 = vmatpush1.msra.mxu0 0.0
        %225 = vmatprep.subr.mxu0 0.0
        %226 = vmatpush1.msra.mxu0 0.0
        %227 = vmatprep.subr.mxu0 0.0
        %228 = vmatpush1.msra.mxu0 0.0
        %229 = vmatprep.subr.mxu0 0.0
        %230 = vmatpush1.msra.mxu0 0.0
        %231 = vmatprep.subr.mxu0 0.0
        %232 = vmatpush1.msra.mxu0 0.0
        %233 = vmatprep.subr.mxu0 0.0
        %234 = vmatpush1.msra.mxu0 0.0
        %235 = vmatprep.subr.mxu0 0.0
        %236 = vmatpush1.msra.mxu0 0.0
        %237 = vmatprep.subr.mxu0 0.0
        %238 = vmatpush1.msra.mxu0 0.0
        %239 = vmatprep.subr.mxu0 0.0
        %240 = vmatpush1.msra.mxu0 0.0
        %241 = vmatprep.subr.mxu0 0.0
        %242 = vmatpush1.msra.mxu0 0.0
        %243 = vmatprep.subr.mxu0 0.0
        %244 = vmatpush1.msra.mxu0 0.0
        %245 = vmatprep.subr.mxu0 0.0
        %246 = vmatpush1.msra.mxu0 0.0
        %247 = vmatprep.subr.mxu0 0.0
        %248 = vmatpush1.msra.mxu0 0.0
        %249 = vmatprep.subr.mxu0 0.0
        %250 = vmatpush1.msra.mxu0 0.0
        %251 = vmatprep.subr.mxu0 0.0
        %252 = vmatpush1.msra.mxu0 0.0
        %253 = vmatprep.subr.mxu0 0.0
        %254 = vmatpush1.msra.mxu0 0.0
        %255 = vmatprep.subr.mxu0 0.0
        %256 = vmatpush1.msra.mxu0 0.0
        %257 = vmatprep.subr.mxu0 0.0
        %258 = vmatpush1.msra.mxu0 0.0
        %259 = vmatprep.subr.mxu0 0.0
        %260 = vmatpush1.msra.mxu0 0.0
        %261 = vmatprep.subr.mxu0 0.0
        %262 = vmatpush1.msra.mxu0 0.0
        %263 = vmatprep.subr.mxu0 0.0
        %264 = vmatpush1.msra.mxu0 0.0
        %265 = vmatprep.mubr.f32.mxu0 0.0
        %266 = vmatmul.mubr.f32.gmra.mrb[0].mxu0 %v199
        %v267 = vpop.f32.mrb[0].mxu0
        %v268 = vadd.f32 0.0, %v267
        %v269 = vpop.f32.mrb[0].mxu0
        %270 = vdwg.mxu0
        %vm271 = vcmask 128000
        %272 = vst.msk [vmem:[%s194] sm:$0x3f] %vm271, %v268
        %p273 = scmp.lt.s32.totalorder %s21, 1
        %s274 = scalar_select %p273, %s21, 1
        %p275 = scmp.lt.s32.totalorder %s22, 0
        %s276 = scalar_select %p275, %s22, 0
        %s277 = sadd.s32 %s276, %s274
        %s278 = smul.addr %s277, 8
        %s279 = scalar_lea.vmem %s2, %s278
        // Predicated region
        $region37: #{nnwa_forward.1} parent=27 // pred_check
          %p280 = pneg %p98
        $region38: #{nnwa_forward.1} parent=27 // pred_check_branch
          %282 = sbr.rel (%p280) target = $region40
        $region39: #{nnwa_forward.1} parent=27 // pred_region
          _
        $region40: #{nnwa_forward.1} parent=27 // pred_fallthru
          _
      $region28: #{nnwa_forward.1} parent=5 // pred_fallthru
        _
      %p283 = scmp.le.s32.totalorder 2, %s12
      // Predicated region
      $region41: #{nnwa_forward.1} parent=5 // pred_check
        %p284 = pneg %p283
      $region42: #{nnwa_forward.1} parent=5 // pred_check_branch
        %286 = sbr.rel (%p284) target = $region44
      $region43: #{nnwa_forward.1} parent=5 // pred_region
        %s287 = ssub.s32 %s12, 2
        // Predicated region
        $region45: #{nnwa_forward.1} parent=43 // pred_check
          %p288 = pneg %p104
        $region46: #{nnwa_forward.1} parent=43 // pred_check_branch
          %290 = sbr.rel (%p288) target = $region48
        $region47: #{nnwa_forward.1} parent=43 // pred_region
          %p291 = scmp.lt.s32.totalorder %s23, 1
          %s292 = scalar_select %p291, %s23, 1
          %p293 = scmp.lt.s32.totalorder %s24, 0
          %s294 = scalar_select %p293, %s24, 0
          %s295 = sadd.s32 %s294, %s292
          %s296 = smul.addr %s295, 8
          %s297 = scalar_lea.vmem %s2, %s296
        $region48: #{nnwa_forward.1} parent=43 // pred_fallthru
          _
      $region44: #{nnwa_forward.1} parent=5 // pred_fallthru
        _
    $region6: #{nnwa_forward.1} parent=1 // loop_footer
      %s16 = sadd.s32 1, %s12
    $region7: #{nnwa_forward.1} parent=1 // loop_footer_branch
      %11 = sbr.rel target = $region3
    $region8: #{nnwa_forward.1} parent=1 // loop_exit
      _
    %298 = vsyncpa [#allocation3], 1
    %s299 = scalar_lea.sflag [#allocation3], 1
    %300 = vsyncpa %s299, 1
    %301 = vsyncpa [#allocation5], 1
    %s302 = scalar_lea.sflag [#allocation5], 1
    %303 = vsyncpa %s302, 1

</llo_original>
